<compile_context>
chip_gen: v7x
topology: tpu7x:2x2x1
jax: 0.10.0
libtpu: 0.0.40
codegen_flags: <defaults>
</compile_context>

<pallas_src>
import functools

import jax
import jax.numpy as jnp
from jax import lax
from jax.experimental import pallas as pl
from jax.experimental.pallas import tpu as pltpu

LANE = 128
SUBLANE = 8
TARGET_BLOCK_ROWS = 4096   # (4096, 128) f32 tile = 2 MiB/input/step (v6e/v7x)
TARGET_BLOCK_ROWS_V5E = 2048


def _device_kind():
    try:
        return jax.devices()[0].device_kind.lower()
    except Exception:
        return ""


def _std_mean_loss_kernel(a_ref, b_ref, o_ref, *, block_rows, num_blocks,
                          steps_per_group, last_valid_rows):
    """Accumulate per-lane partials of dot(a,b), ||a||^2, ||b||^2.

    a_ref, b_ref : (block_rows, LANE) VMEM tiles of the flattened inputs
    o_ref        : (1, 3, 8, LANE) per-group partial-sum output block
                   (resident across the `s` axis; accumulated in place)
    """
    g = pl.program_id(0)
    s = pl.program_id(1)
    flat_step = g * steps_per_group + s

    @pl.when(s == 0)
    def _():
        o_ref[...] = jnp.zeros_like(o_ref)

    def accumulate(nchunks):
        # Fused single-pass reduce: each (8, LANE) chunk of a and b is loaded
        # exactly once and feeds all three products (6 VALU ops / vreg pair).
        def body(i, carry):
            s_ab, s_aa, s_bb = carry
            r = pl.multiple_of(i * SUBLANE, SUBLANE)
            a = a_ref[pl.ds(r, SUBLANE), :].astype(jnp.float32)
            b = b_ref[pl.ds(r, SUBLANE), :].astype(jnp.float32)
            return (s_ab + a * b, s_aa + a * a, s_bb + b * b)

        zeros = jnp.zeros((SUBLANE, LANE), jnp.float32)
        if nchunks % 8 == 0:
            unroll = 8
        elif nchunks % 4 == 0:
            unroll = 4
        elif nchunks % 2 == 0:
            unroll = 2
        else:
            unroll = 1
        s_ab, s_aa, s_bb = lax.fori_loop(0, nchunks, body,
                                         (zeros, zeros, zeros),
                                         unroll=unroll)
        o_ref[0, 0] += s_ab
        o_ref[0, 1] += s_aa
        o_ref[0, 2] += s_bb

    full_chunks = block_rows // SUBLANE
    last_chunks = last_valid_rows // SUBLANE
    is_real = flat_step < num_blocks            # skip grid-padding steps
    is_last = flat_step == num_blocks - 1

    if last_valid_rows == block_rows:
        # No partial tail block: same static trip count for every real step.
        @pl.when(is_real)
        def _():
            accumulate(full_chunks)
    else:
        @pl.when(jnp.logical_and(is_real, jnp.logical_not(is_last)))
        def _():
            accumulate(full_chunks)

        @pl.when(is_last)
        def _():
            # Partial last block: just run fewer (statically-known) chunks.
            accumulate(last_chunks)


@jax.jit
def std_mean_loss(logits, targets):
    """loss = <a_hat, b_hat> with a_hat = a / max(||a||, 1e-12) (F.normalize)."""
    a_flat = jnp.ravel(logits)    # keep native dtype; kernel widens to f32
    b_flat = jnp.ravel(targets)
    n = a_flat.shape[0]
    itemsize = jnp.dtype(a_flat.dtype).itemsize

    chunk_elems = SUBLANE * LANE            # 1024
    n_main = (n // chunk_elems) * chunk_elems
    rows_main = n_main // LANE              # always a multiple of 8

    sums = jnp.zeros((3,), jnp.float32)     # (dot, ||a||^2, ||b||^2)

    if rows_main > 0:
        a_main = a_flat if n_main == n else a_flat[:n_main]
        b_main = b_flat if n_main == n else b_flat[:n_main]
        a2d = a_main.reshape(rows_main, LANE)   # contiguous reshape
        b2d = b_main.reshape(rows_main, LANE)

        kind = _device_kind()
        target_rows = TARGET_BLOCK_ROWS_V5E if "v5" in kind else TARGET_BLOCK_ROWS
        block_rows = target_rows if rows_main >= target_rows else rows_main
        num_blocks = pl.cdiv(rows_main, block_rows)
        last_valid_rows = rows_main - (num_blocks - 1) * block_rows

        # 2-way TensorCore split only where there are 2 TCs per chip (v7x).
        groups_avail = 2 if "v7" in kind else 1
        groups = min(groups_avail, num_blocks)
        steps = pl.cdiv(num_blocks, groups)

        if groups * steps == num_blocks:
            def in_map(g, s):
                return (g * steps + s, 0)
        else:
            def in_map(g, s):   # clamp padded steps; kernel skips their compute
                return (jnp.minimum(g * steps + s, num_blocks - 1), 0)

        if groups > 1:
            dim_sem = (pltpu.CORE_PARALLEL, pltpu.ARBITRARY)
        else:
            dim_sem = ("parallel", "arbitrary")

        # 2 inputs x 2 pipeline buffers x block bytes, plus headroom; never
        # below 32 MiB (safe on v5e 128 MiB / v6e 128 MiB / v7x 64 MiB VMEM).
        block_bytes = block_rows * LANE * itemsize
        vmem_limit = int(max(4 * block_bytes + (8 << 20), 32 << 20))

        cost = pl.CostEstimate(
            flops=6 * n_main,
            transcendentals=0,
            bytes_accessed=2 * n_main * itemsize + groups * 3 * SUBLANE * LANE * 4,
        )

        kernel = functools.partial(
            _std_mean_loss_kernel,
            block_rows=block_rows,
            num_blocks=num_blocks,
            steps_per_group=steps,
            last_valid_rows=last_valid_rows,
        )

        partials = pl.pallas_call(
            kernel,
            out_shape=jax.ShapeDtypeStruct((groups, 3, SUBLANE, LANE),
                                           jnp.float32),
            grid_spec=pltpu.PrefetchScalarGridSpec(
                num_scalar_prefetch=0,
                grid=(groups, steps),
                in_specs=[
                    pl.BlockSpec((block_rows, LANE), in_map),
                    pl.BlockSpec((block_rows, LANE), in_map),
                ],
                out_specs=pl.BlockSpec((1, 3, SUBLANE, LANE),
                                       lambda g, s: (g, 0, 0, 0)),
            ),
            compiler_params=pltpu.CompilerParams(
                dimension_semantics=dim_sem,
                vmem_limit_bytes=vmem_limit,
            ),
            cost_estimate=cost,
        )(a2d, b2d)

        sums = sums + jnp.sum(partials, axis=(0, 2, 3))

    if n_main != n:
        # <1024-element tail handled wrapper-side: no padded copy of inputs.
        a_tail = a_flat[n_main:].astype(jnp.float32)
        b_tail = b_flat[n_main:].astype(jnp.float32)
        sums = sums + jnp.stack([
            jnp.sum(a_tail * b_tail),
            jnp.sum(a_tail * a_tail),
            jnp.sum(b_tail * b_tail),
        ])

    eps = jnp.float32(1e-12)   # matches F.normalize default eps
    norm_a = jnp.maximum(jnp.sqrt(sums[1]), eps)
    norm_b = jnp.maximum(jnp.sqrt(sums[2]), eps)
    loss = sums[0] / (norm_a * norm_b)
    return loss.reshape(1, 1)   # matches torch's a.mm(b.t())


def _ref_loss(x, y):
    xf = jnp.ravel(x).astype(jnp.float32)
    yf = jnp.ravel(y).astype(jnp.float32)
    dot = jnp.sum(xf * yf)
    na = jnp.maximum(jnp.sqrt(jnp.sum(xf * xf)), 1e-12)
    nb = jnp.maximum(jnp.sqrt(jnp.sum(yf * yf)), 1e-12)
    return (dot / (na * nb)).reshape(1, 1)


if __name__ == "__main__":
    key = jax.random.PRNGKey(0)
    k1, k2, k3, k4, k5, k6 = jax.random.split(key, 6)

    # Small NCHW case (single block, fully aligned): n = 2*4*16*16 = 2048.
    logits = jax.random.normal(k1, (2, 4, 16, 16), dtype=jnp.float32)
    targets = jax.random.normal(k2, (2, 4, 16, 16), dtype=jnp.float32)
    loss = jax.block_until_ready(std_mean_loss(logits, targets))
    ref = _ref_loss(logits, targets)
    assert loss.shape == (1, 1)
    assert jnp.allclose(loss, ref, atol=1e-5, rtol=1e-5), (loss, ref)

    # Multi-block streaming with a partial (shorter-trip-count) last block:
    # n = 2*4*256*300 = 614400 -> 4800 rows -> 2 blocks of 4096/704 rows.
    logits2 = jax.random.normal(k3, (2, 4, 256, 300), dtype=jnp.float32)
    targets2 = jax.random.normal(k4, (2, 4, 256, 300), dtype=jnp.float32)
    loss2 = jax.block_until_ready(std_mean_loss(logits2, targets2))
    ref2 = _ref_loss(logits2, targets2)
    assert loss2.shape == (1, 1)
    assert jnp.allclose(loss2, ref2, atol=2e-5, rtol=1e-4), (loss2, ref2)

    # Misaligned case exercising the wrapper-side tail fix-up:
    # n = 3*5*33*37 = 18315 -> 17408 kernel elems + 907-element tail.
    logits3 = jax.random.normal(k5, (3, 5, 33, 37), dtype=jnp.float32)
    targets3 = jax.random.normal(k6, (3, 5, 33, 37), dtype=jnp.float32)
    loss3 = jax.block_until_ready(std_mean_loss(logits3, targets3))
    ref3 = _ref_loss(logits3, targets3)
    assert loss3.shape == (1, 1)
    assert jnp.allclose(loss3, ref3, atol=1e-5, rtol=1e-4), (loss3, ref3)

    print("KERNEL_OK")
</pallas_src>

<mosaic_0001>
module attributes {stable_mosaic.version = 11 : i64} {
  func.func @_std_mean_loss_kernel(%arg0: i32, %arg1: i32, %arg2: memref<16x128xf32, #tpu.memory_space<vmem>>, %arg3: memref<16x128xf32, #tpu.memory_space<vmem>>, %arg4: memref<1x3x8x128xf32, #tpu.memory_space<vmem>>) attributes {dimension_semantics = [#tpu.dimension_semantics<parallel>, #tpu.dimension_semantics<arbitrary>], iteration_bounds = array<i64: 1, 1>, scalar_prefetch = 0 : i64, scratch_operands = 0 : i64, tpu.core_type = #tpu.core_type<tc>, window_params = [{transform_indices = @transform_0, window_bounds = array<i64: 16, 128>}, {transform_indices = @transform_1, window_bounds = array<i64: 16, 128>}, {transform_indices = @transform_2, window_bounds = array<i64: 1, 3, 8, 128>}]} {
    %c1_i32 = arith.constant 1 : i32
    %0 = arith.muli %arg0, %c1_i32 : i32
    %1 = arith.addi %0, %arg1 : i32
    %c0_i32 = arith.constant 0 : i32
    %2 = arith.cmpi eq, %arg1, %c0_i32 : i32
    %3 = arith.extui %2 : i1 to i32
    %c0_i32_0 = arith.constant 0 : i32
    %4 = arith.cmpi ne, %3, %c0_i32_0 : i32
    scf.if %4 {
      %cst = arith.constant 0.000000e+00 : f32
      %8 = vector.broadcast %cst : f32 to vector<1x3x8x128xf32>
      %c0 = arith.constant 0 : index
      %c0_3 = arith.constant 0 : index
      %c0_4 = arith.constant 0 : index
      %c0_5 = arith.constant 0 : index
      %9 = vector.load %arg4[%c0, %c0_3, %c0_4, %c0_5] : memref<1x3x8x128xf32, #tpu.memory_space<vmem>>, vector<1x3x8x128xf32>
      tpu.vector_store %arg4[%c0, %c0_3, %c0_4, %c0_5], %8 {strides = array<i32>} : memref<1x3x8x128xf32, #tpu.memory_space<vmem>>, vector<1x3x8x128xf32>,
    } else {
    }
    %c1_i32_1 = arith.constant 1 : i32
    %5 = arith.cmpi slt, %1, %c1_i32_1 : i32
    %6 = arith.extui %5 : i1 to i32
    %c0_i32_2 = arith.constant 0 : i32
    %7 = arith.cmpi ne, %6, %c0_i32_2 : i32
    scf.if %7 {
      %cst = arith.constant 0.000000e+00 : f32
      %8 = vector.broadcast %cst : f32 to vector<8x128xf32>
      %c0_i32_3 = arith.constant 0 : i32
      %c8_i32 = arith.constant 8 : i32
      %9 = arith.muli %c0_i32_3, %c8_i32 : i32
      %10 = tpu.assume_multiple %9, 8 : i32
      %11 = arith.index_cast %10 : i32 to index
      %c0 = arith.constant 0 : index
      %12 = vector.load %arg2[%11, %c0] : memref<16x128xf32, #tpu.memory_space<vmem>>, vector<8x128xf32>
      %13 = arith.index_cast %10 : i32 to index
      %c0_4 = arith.constant 0 : index
      %14 = vector.load %arg3[%13, %c0_4] : memref<16x128xf32, #tpu.memory_space<vmem>>, vector<8x128xf32>
      %15 = arith.mulf %12, %14 : vector<8x128xf32>
      %16 = arith.addf %8, %15 : vector<8x128xf32>
      %17 = arith.mulf %12, %12 : vector<8x128xf32>
      %18 = arith.addf %8, %17 : vector<8x128xf32>
      %19 = arith.mulf %14, %14 : vector<8x128xf32>
      %20 = arith.addf %8, %19 : vector<8x128xf32>
      %c1_i32_5 = arith.constant 1 : i32
      %c8_i32_6 = arith.constant 8 : i32
      %21 = arith.muli %c1_i32_5, %c8_i32_6 : i32
      %22 = tpu.assume_multiple %21, 8 : i32
      %23 = arith.index_cast %22 : i32 to index
      %c0_7 = arith.constant 0 : index
      %24 = vector.load %arg2[%23, %c0_7] : memref<16x128xf32, #tpu.memory_space<vmem>>, vector<8x128xf32>
      %25 = arith.index_cast %22 : i32 to index
      %c0_8 = arith.constant 0 : index
      %26 = vector.load %arg3[%25, %c0_8] : memref<16x128xf32, #tpu.memory_space<vmem>>, vector<8x128xf32>
      %27 = arith.mulf %24, %26 : vector<8x128xf32>
      %28 = arith.addf %16, %27 : vector<8x128xf32>
      %29 = arith.mulf %24, %24 : vector<8x128xf32>
      %30 = arith.addf %18, %29 : vector<8x128xf32>
      %31 = arith.mulf %26, %26 : vector<8x128xf32>
      %32 = arith.addf %20, %31 : vector<8x128xf32>
      %c2_i32 = arith.constant 2 : i32
      %c0_9 = arith.constant 0 : index
      %c0_10 = arith.constant 0 : index
      %c0_11 = arith.constant 0 : index
      %c0_12 = arith.constant 0 : index
      %33 = vector.load %arg4[%c0_9, %c0_10, %c0_11, %c0_12] : memref<1x3x8x128xf32, #tpu.memory_space<vmem>>, vector<1x1x8x128xf32>
      %34 = vector.shape_cast %33 : vector<1x1x8x128xf32> to vector<8x128xf32>
      %35 = arith.addf %34, %28 : vector<8x128xf32>
      %c0_13 = arith.constant 0 : index
      %c0_14 = arith.constant 0 : index
      %c0_15 = arith.constant 0 : index
      %c0_16 = arith.constant 0 : index
      %36 = vector.load %arg4[%c0_13, %c0_14, %c0_15, %c0_16] : memref<1x3x8x128xf32, #tpu.memory_space<vmem>>, vector<1x1x8x128xf32>
      %37 = vector.shape_cast %36 : vector<1x1x8x128xf32> to vector<8x128xf32>
      %38 = vector.shape_cast %35 : vector<8x128xf32> to vector<1x1x8x128xf32>
      tpu.vector_store %arg4[%c0_13, %c0_14, %c0_15, %c0_16], %38 {strides = array<i32>} : memref<1x3x8x128xf32, #tpu.memory_space<vmem>>, vector<1x1x8x128xf32>,
      %c0_17 = arith.constant 0 : index
      %c1 = arith.constant 1 : index
      %c0_18 = arith.constant 0 : index
      %c0_19 = arith.constant 0 : index
      %39 = vector.load %arg4[%c0_17, %c1, %c0_18, %c0_19] : memref<1x3x8x128xf32, #tpu.memory_space<vmem>>, vector<1x1x8x128xf32>
      %40 = vector.shape_cast %39 : vector<1x1x8x128xf32> to vector<8x128xf32>
      %41 = arith.addf %40, %30 : vector<8x128xf32>
      %c0_20 = arith.constant 0 : index
      %c1_21 = arith.constant 1 : index
      %c0_22 = arith.constant 0 : index
      %c0_23 = arith.constant 0 : index
      %42 = vector.load %arg4[%c0_20, %c1_21, %c0_22, %c0_23] : memref<1x3x8x128xf32, #tpu.memory_space<vmem>>, vector<1x1x8x128xf32>
      %43 = vector.shape_cast %42 : vector<1x1x8x128xf32> to vector<8x128xf32>
      %44 = vector.shape_cast %41 : vector<8x128xf32> to vector<1x1x8x128xf32>
      tpu.vector_store %arg4[%c0_20, %c1_21, %c0_22, %c0_23], %44 {strides = array<i32>} : memref<1x3x8x128xf32, #tpu.memory_space<vmem>>, vector<1x1x8x128xf32>,
      %c0_24 = arith.constant 0 : index
      %c2 = arith.constant 2 : index
      %c0_25 = arith.constant 0 : index
      %c0_26 = arith.constant 0 : index
      %45 = vector.load %arg4[%c0_24, %c2, %c0_25, %c0_26] : memref<1x3x8x128xf32, #tpu.memory_space<vmem>>, vector<1x1x8x128xf32>
      %46 = vector.shape_cast %45 : vector<1x1x8x128xf32> to vector<8x128xf32>
      %47 = arith.addf %46, %32 : vector<8x128xf32>
      %c0_27 = arith.constant 0 : index
      %c2_28 = arith.constant 2 : index
      %c0_29 = arith.constant 0 : index
      %c0_30 = arith.constant 0 : index
      %48 = vector.load %arg4[%c0_27, %c2_28, %c0_29, %c0_30] : memref<1x3x8x128xf32, #tpu.memory_space<vmem>>, vector<1x1x8x128xf32>
      %49 = vector.shape_cast %48 : vector<1x1x8x128xf32> to vector<8x128xf32>
      %50 = vector.shape_cast %47 : vector<8x128xf32> to vector<1x1x8x128xf32>
      tpu.vector_store %arg4[%c0_27, %c2_28, %c0_29, %c0_30], %50 {strides = array<i32>} : memref<1x3x8x128xf32, #tpu.memory_space<vmem>>, vector<1x1x8x128xf32>,
    } else {
    }
    return
  }
  func.func @transform_0(%arg0: i32, %arg1: i32) -> (i32, i32) {
    %c1_i32 = arith.constant 1 : i32
    %0 = arith.muli %arg0, %c1_i32 : i32
    %1 = arith.addi %0, %arg1 : i32
    %c0_i32 = arith.constant 0 : i32
    %c0_i32_0 = arith.constant 0 : i32
    return %1, %c0_i32 : i32, i32
  }
  func.func @transform_1(%arg0: i32, %arg1: i32) -> (i32, i32) {
    %c1_i32 = arith.constant 1 : i32
    %0 = arith.muli %arg0, %c1_i32 : i32
    %1 = arith.addi %0, %arg1 : i32
    %c0_i32 = arith.constant 0 : i32
    %c0_i32_0 = arith.constant 0 : i32
    return %1, %c0_i32 : i32, i32
  }
  func.func @transform_2(%arg0: i32, %arg1: i32) -> (i32, i32, i32, i32) {
    %c0_i32 = arith.constant 0 : i32
    %c0_i32_0 = arith.constant 0 : i32
    %c0_i32_1 = arith.constant 0 : i32
    %c0_i32_2 = arith.constant 0 : i32
    return %arg0, %c0_i32, %c0_i32_0, %c0_i32_1 : i32, i32, i32, i32
  }
}

</mosaic_0001>

<llo_original>
// kernel: std_mean_loss.1
$region0: #{std_mean_loss.1}
  #allocation0 [shape = 'u32[]', space=smem, size = 0x4, offset = 0x4, fixed_abs, tag = 'smem constant byte address 0x4 - core index']
  #allocation1 [shape = 'u32[144,128]{1,0:T(1,128)}', space=vmem, size = 0x12000, scoped, tag = 'internal scratch']
  %s0 = inlined_call_operand.vmem [shape: f32[16,128], index: 0, kind: input, shape index: {}]
  %s1 = inlined_call_operand.vmem [shape: f32[16,128], index: 1, kind: input, shape index: {}]
  %s2 = inlined_call_operand.vmem [shape: f32[1,3,8,128], index: 2, kind: output, shape index: {}]
  %s3 = sld [smem:[#allocation0]]
  $region26: #{std_mean_loss.1} parent=0
    _
  %s5 = ssub.s32 1, %s3
  %s6 = scalar_select 0, %s5, %s3
  // Predicated region
  $region2: #{std_mean_loss.1} parent=0 // pred_check
    _
  $region3: #{std_mean_loss.1} parent=0 // pred_check_branch
    %8 = sbr.rel (0) target = $region5
  $region4: #{std_mean_loss.1} parent=0 // pred_region
    %s9 = sadd.s32 0, 0
    %s10 = smul.u32 2, %s9
    %p11 = scmp.lt.s32.totalorder %s10, 1
    %s12 = scalar_select %p11, %s10, 1
    %s13 = smul.addr %s12, 8
    %s14 = scalar_lea.vmem %s0, %s13
    %s15 = sadd.s32 0, 0
    %s16 = smul.u32 2, %s15
  $region5: #{std_mean_loss.1} parent=0 // pred_fallthru
    _
  // Predicated region
  $region6: #{std_mean_loss.1} parent=0 // pred_check
    _
  $region7: #{std_mean_loss.1} parent=0 // pred_check_branch
    %18 = sbr.rel (0) target = $region9
  $region8: #{std_mean_loss.1} parent=0 // pred_region
    %s19 = sadd.s32 0, 0
    %s20 = smul.u32 2, %s19
    %p21 = scmp.lt.s32.totalorder %s20, 1
    %s22 = scalar_select %p21, %s20, 1
    %s23 = smul.addr %s22, 8
    %s24 = scalar_lea.vmem %s1, %s23
    %s25 = sadd.s32 0, 0
    %s26 = smul.u32 2, %s25
  $region9: #{std_mean_loss.1} parent=0 // pred_fallthru
    _
  %s27 = sadd.s32 0, 0
  %s28 = smul.u32 2, %s27
  %p29 = scmp.lt.s32.totalorder %s28, 1
  %s30 = scalar_select %p29, %s28, 1
  %s31 = smul.addr %s30, 8
  %s32 = scalar_lea.vmem %s0, %s31
  %s33 = sadd.s32 0, 0
  %s34 = smul.u32 2, %s33
  %p35 = scmp.lt.s32.totalorder %s34, 1
  %s36 = scalar_select %p35, %s34, 1
  %s37 = smul.addr %s36, 8
  %s38 = scalar_lea.vmem %s1, %s37
  %s39 = sadd.s32 0, 0
  %s40 = smul.u32 2, %s39
  %p41 = scmp.lt.s32.totalorder %s40, 1
  %s42 = scalar_select %p41, %s40, 1
  %s43 = smul.addr %s42, 8
  %s44 = scalar_lea.vmem %s0, %s43
  %s45 = sadd.s32 0, 0
  %s46 = smul.u32 2, %s45
  %s47 = sadd.s32 0, 0
  %s48 = smul.u32 2, %s47
  %p49 = scmp.lt.s32.totalorder %s48, 1
  %s50 = scalar_select %p49, %s48, 1
  %s51 = smul.addr %s50, 8
  %s52 = scalar_lea.vmem %s1, %s51
  %s53 = sadd.s32 0, 0
  %s54 = smul.u32 2, %s53
  %s55 = sadd.s32 0, 0
  %p56 = scmp.eq.s32.totalorder 0, 0
  // Predicated region
  $region10: #{std_mean_loss.1} parent=0 // pred_check
    %p57 = pneg %p56
  $region11: #{std_mean_loss.1} parent=0 // pred_check_branch
    %59 = sbr.rel (%p57) target = $region13
  $region12: #{std_mean_loss.1} parent=0 // pred_region
    %60 = vst [vmem:[%s2] sm:$0xff] 0.0
    %61 = vst [vmem:[%s2 + $0x8] sm:$0xff] 0.0
    %62 = vst [vmem:[%s2 + $0x10] sm:$0xff] 0.0
  $region13: #{std_mean_loss.1} parent=0 // pred_fallthru
    _
  %p63 = scmp.lt.s32.totalorder %s55, 1
  // Predicated region
  $region14: #{std_mean_loss.1} parent=0 // pred_check
    %p64 = pneg %p63
  $region15: #{std_mean_loss.1} parent=0 // pred_check_branch
    %66 = sbr.rel (%p64) target = $region17
  $region16: #{std_mean_loss.1} parent=0 // pred_region
    %v67 = vld [vmem:[%s44] sm:$0xff]
    %v68 = vld [vmem:[%s52] sm:$0xff]
    %v69 = vmul.f32 %v67, %v68
    %v70 = vadd.f32 %v69, 0.0
    %v71 = vmul.f32 %v67, %v67
    %v72 = vadd.f32 %v71, 0.0
    %v73 = vmul.f32 %v68, %v68
    %v74 = vadd.f32 %v73, 0.0
    %s75 = scalar_lea.vmem %s44, 8
    %v76 = vld [vmem:[%s75] sm:$0xff]
    %s77 = scalar_lea.vmem %s52, 8
    %v78 = vld [vmem:[%s77] sm:$0xff]
    %v79 = vmul.f32 %v76, %v78
    %v80 = vadd.f32 %v70, %v79
    %v81 = vmul.f32 %v76, %v76
    %v82 = vadd.f32 %v72, %v81
    %v83 = vmul.f32 %v78, %v78
    %v84 = vadd.f32 %v74, %v83
    %v85 = vld [vmem:[%s2] sm:$0xff]
    %v86 = vadd.f32 %v85, %v80
    %87 = vst [vmem:[%s2] sm:$0xff] %v86
    %s88 = scalar_lea.vmem %s2, 8
    %v89 = vld [vmem:[%s88] sm:$0xff]
    %v90 = vadd.f32 %v89, %v82
    %91 = vst [vmem:[%s88] sm:$0xff] %v90
    %s92 = scalar_lea.vmem %s2, 16
    %v93 = vld [vmem:[%s92] sm:$0xff]
    %v94 = vadd.f32 %v93, %v84
    %95 = vst [vmem:[%s92] sm:$0xff] %v94
  $region17: #{std_mean_loss.1} parent=0 // pred_fallthru
    _
  // Predicated region
  $region18: #{std_mean_loss.1} parent=0 // pred_check
    _
  $region19: #{std_mean_loss.1} parent=0 // pred_check_branch
    %97 = sbr.rel (0) target = $region21
  $region20: #{std_mean_loss.1} parent=0 // pred_region
    _
  $region21: #{std_mean_loss.1} parent=0 // pred_fallthru
    _
  // Predicated region
  $region22: #{std_mean_loss.1} parent=0 // pred_check
    _
  $region23: #{std_mean_loss.1} parent=0 // pred_check_branch
    %99 = sbr.rel (0) target = $region25
  $region24: #{std_mean_loss.1} parent=0 // pred_region
    _
  $region25: #{std_mean_loss.1} parent=0 // pred_fallthru
    _

</llo_original>
